<compile_context>
chip_gen: v7x
topology: tpu7x:2x2x1
jax: 0.10.0
libtpu: 0.0.40
codegen_flags: <defaults>
</compile_context>

<pallas_src>
import jax
import jax.numpy as jnp
from jax import lax
from jax.experimental import pallas as pl
from jax.experimental.pallas import tpu as pltpu


def _cdiv(a, b):
    return -(-a // b)


def _round_up(v, d):
    return ((v + d - 1) // d) * d


def _pick_tile(total, cap):
    """Largest tile <= cap that divides `total` (total is a multiple of 128).

    Prefers multiples of 256 (full MXU width on v6e/v7x), falls back to
    multiples of 128 (fine for v5e's 128x128 MXUs).
    """
    cap = min(cap, total)
    if cap >= 256:
        cand = (cap // 256) * 256
        while cand >= 256:
            if total % cand == 0:
                return cand
            cand -= 256
    cand = max((cap // 128) * 128, 128)
    while cand > 128 and total % cand != 0:
        cand -= 128
    return cand


# ----------------------------------------------------------------------------
# Kernels
# ----------------------------------------------------------------------------
def _linear_kernel(x_ref, w_ref, b_ref, o_ref, acc_ref):
    """One (tm, tn) output tile; K accumulated over the last grid axis."""
    k = pl.program_id(2)

    @pl.when(k == 0)
    def _():
        # Seed the f32 accumulator with the bias row (broadcast over tm rows).
        acc_ref[...] = jnp.broadcast_to(b_ref[...], acc_ref.shape)

    # x tile: (tm, tk) bf16, w tile: (tn, tk) bf16 -> contract last dims = x @ w.T
    acc_ref[...] += lax.dot_general(
        x_ref[...],
        w_ref[...],
        dimension_numbers=(((1,), (1,)), ((), ())),
        preferred_element_type=jnp.float32,
    )

    @pl.when(k == pl.num_programs(2) - 1)
    def _():
        o_ref[...] = acc_ref[...].astype(o_ref.dtype)


def _linear_single_kernel(x_ref, w_ref, b_ref, o_ref):
    """Single-tile fast path: no scratch, no init/finalize control flow."""
    acc = lax.dot_general(
        x_ref[...],
        w_ref[...],
        dimension_numbers=(((1,), (1,)), ((), ())),
        preferred_element_type=jnp.float32,
    )
    o_ref[...] = (acc + b_ref[...]).astype(o_ref.dtype)


# ----------------------------------------------------------------------------
# Wrapper
# ----------------------------------------------------------------------------
def recover_feat_forward(x, weight, bias, *,
                         compute_dtype=jnp.bfloat16,
                         tm=512, tn=512, tk=2048,
                         vmem_budget_bytes=28 * 1024 * 1024):
    """Forward pass of Recover_feat.

    Args:
      x:      (N, dim_in) or (N, C, H, W) with C*H*W == dim_in
      weight: (dim_out, dim_in)   -- PyTorch nn.Linear layout (NOT transposed)
      bias:   (dim_out,)
    Returns:
      (N, dim_out) in the promoted dtype of the inputs.
    """
    if x.ndim == 4:
        x = x.reshape(x.shape[0], -1)  # same as torch .view(N, -1) on NCHW

    m, dim_in = x.shape
    dim_out, wk = weight.shape
    assert wk == dim_in, (wk, dim_in)

    out_dtype = jnp.result_type(x.dtype, weight.dtype, bias.dtype)

    # --- tile-size selection --------------------------------------------------
    k_p = _round_up(dim_in, 128)
    n_p = _round_up(dim_out, 128)

    # M: split into near-equal sublane-aligned tiles -> padding < one sublane
    # tile per M tile (avoids the round_up(m, tm) blow-up for awkward batches).
    n_m_tiles = max(1, _cdiv(m, tm))
    tm_eff = _round_up(_cdiv(m, n_m_tiles), 8)
    m_p = n_m_tiles * tm_eff

    tk_eff = _pick_tile(k_p, tk)
    tn_eff = _pick_tile(n_p, tn)

    # v7x megacore: ensure >=2 parallel (M,N) tiles when there is real work so
    # both TensorCores get a share (moot on 1-TC v5e/v6e).
    if (n_m_tiles * (n_p // tn_eff) == 1 and n_p >= 256
            and m_p * n_p * k_p >= (1 << 23)):
        tn_eff = _pick_tile(n_p, n_p // 2)

    # VMEM footprint: 2x double-buffered inputs + 2x output + f32 accumulator.
    cbytes = jnp.dtype(compute_dtype).itemsize
    obytes = jnp.dtype(out_dtype).itemsize

    def _footprint(tm_, tn_, tk_):
        return (2 * (tm_ * tk_ + tn_ * tk_) * cbytes
                + 2 * tm_ * tn_ * obytes + tm_ * tn_ * 4 + 2 * tn_ * 4)

    while _footprint(tm_eff, tn_eff, tk_eff) > vmem_budget_bytes and tk_eff > 128:
        tk_eff = _pick_tile(k_p, tk_eff - 128)
    while _footprint(tm_eff, tn_eff, tk_eff) > vmem_budget_bytes and tn_eff > 128:
        tn_eff = _pick_tile(n_p, tn_eff - 128)

    # --- operand preparation --------------------------------------------------
    # bf16 streamed operands, f32 accumulation.  Use prepare_recover_feat_params
    # at init time so the weight is not re-cast (extra HBM pass) every call.
    if x.dtype != compute_dtype:
        x = x.astype(compute_dtype)
    if weight.dtype != compute_dtype:
        weight = weight.astype(compute_dtype)
    b_p = bias.astype(jnp.float32)

    x_p = x
    if (m_p, k_p) != (m, dim_in):
        x_p = jnp.pad(x, ((0, m_p - m), (0, k_p - dim_in)))
    w_p = weight
    if (n_p, k_p) != (dim_out, dim_in):
        # Only hit when dim_out/dim_in are not already 128-aligned.
        w_p = jnp.pad(weight, ((0, n_p - dim_out), (0, k_p - dim_in)))
    if n_p != dim_out:
        b_p = jnp.pad(b_p, (0, n_p - dim_out))
    b2 = b_p.reshape(1, n_p)

    grid = (m_p // tm_eff, n_p // tn_eff, k_p // tk_eff)

    cost = pl.CostEstimate(
        flops=2 * m_p * k_p * n_p,
        transcendentals=0,
        bytes_accessed=(m_p * k_p * grid[1] + n_p * k_p * grid[0]) * cbytes
        + m_p * n_p * obytes + n_p * 4,
    )

    if grid == (1, 1, 1):
        # Single-tile fast path (demo-sized problems): one fused step.
        out = pl.pallas_call(
            _linear_single_kernel,
            out_shape=jax.ShapeDtypeStruct((m_p, n_p), out_dtype),
            grid_spec=pltpu.PrefetchScalarGridSpec(
                num_scalar_prefetch=0,
                grid=(1,),
                in_specs=[
                    pl.BlockSpec((m_p, k_p), lambda i: (0, 0)),
                    pl.BlockSpec((n_p, k_p), lambda i: (0, 0)),
                    pl.BlockSpec((1, n_p), lambda i: (0, 0)),
                ],
                out_specs=pl.BlockSpec((m_p, n_p), lambda i: (0, 0)),
            ),
            compiler_params=pltpu.CompilerParams(
                dimension_semantics=("arbitrary",),
                vmem_limit_bytes=32 * 1024 * 1024,
            ),
            cost_estimate=cost,
        )(x_p, w_p, b2)
    else:
        # TODO(synk): on v5e (820 GB/s HBM, 128 MiB VMEM) pipeline_mode=
        # pl.Buffered(3) on the x/weight specs can hide longer DMA windows when
        # there are >=3 K steps; left at the default depth here.
        out = pl.pallas_call(
            _linear_kernel,
            out_shape=jax.ShapeDtypeStruct((m_p, n_p), out_dtype),
            grid_spec=pltpu.PrefetchScalarGridSpec(
                num_scalar_prefetch=0,
                grid=grid,
                in_specs=[
                    # x tile:      (tm, tk)
                    pl.BlockSpec((tm_eff, tk_eff), lambda i, j, k: (i, k)),
                    # weight tile: (tn, tk) -- PyTorch layout, streamed over N, K.
                    pl.BlockSpec((tn_eff, tk_eff), lambda i, j, k: (j, k)),
                    # bias row for this N tile (resident across K).
                    pl.BlockSpec((1, tn_eff), lambda i, j, k: (0, j)),
                ],
                out_specs=pl.BlockSpec((tm_eff, tn_eff), lambda i, j, k: (i, j)),
                scratch_shapes=[pltpu.VMEM((tm_eff, tn_eff), jnp.float32)],
            ),
            compiler_params=pltpu.CompilerParams(
                dimension_semantics=("parallel", "parallel", "arbitrary"),
                vmem_limit_bytes=32 * 1024 * 1024,
            ),
            cost_estimate=cost,
        )(x_p, w_p, b2)

    if (m_p, n_p) != (m, dim_out):
        out = out[:m, :dim_out]
    return out


# ----------------------------------------------------------------------------
# Parameter helpers
# ----------------------------------------------------------------------------
def init_recover_feat_params(key, dim_in, dim_out, dtype=jnp.float32):
    """Deterministic init matching the module: weight ~ N(0, 0.01), bias = 0."""
    w = 0.01 * jax.random.normal(key, (dim_out, dim_in), dtype=dtype)
    b = jnp.zeros((dim_out,), dtype=dtype)
    return w, b


def prepare_recover_feat_params(weight, bias, compute_dtype=jnp.bfloat16):
    """One-time cast of the weight to the kernel compute dtype (bf16).

    Doing this at init avoids a per-call cast (an extra HBM pass over the
    weight) in the weight-bandwidth-bound forward.
    """
    return weight.astype(compute_dtype), bias.astype(jnp.float32)


if __name__ == "__main__":
    key = jax.random.PRNGKey(0)
    kx, kw, kx2, kw2 = jax.random.split(key, 4)

    fwd = jax.jit(recover_feat_forward)

    # --- case 1: module-sized 4D input, exercises the single-tile fast path ---
    N, C, H, W = 2, 4, 16, 16            # dim_in = C*H*W = 1024
    dim_in, dim_out = C * H * W, 128

    x = jax.random.normal(kx, (N, C, H, W), dtype=jnp.float32)
    weight, bias = init_recover_feat_params(kw, dim_in, dim_out)
    w_c, b_c = prepare_recover_feat_params(weight, bias)

    out = jax.block_until_ready(fwd(x, w_c, b_c))
    ref = x.reshape(N, -1) @ weight.T + bias
    assert out.shape == (N, dim_out), out.shape
    assert out.dtype == jnp.float32, out.dtype
    # bf16-input / f32-accumulate matmul vs f32 reference.
    assert jnp.allclose(out, ref, atol=2e-2, rtol=2e-2), "fast-path mismatch"

    # --- case 2: 2D input with multiple K tiles, exercises the tiled path ----
    N2, dim_in2, dim_out2 = 4, 4096, 256
    x2 = jax.random.normal(kx2, (N2, dim_in2), dtype=jnp.float32)
    weight2, bias2 = init_recover_feat_params(kw2, dim_in2, dim_out2)
    w2_c, b2_c = prepare_recover_feat_params(weight2, bias2)

    out2 = jax.block_until_ready(fwd(x2, w2_c, b2_c))
    ref2 = x2 @ weight2.T + bias2
    assert out2.shape == (N2, dim_out2), out2.shape
    assert jnp.allclose(out2, ref2, atol=2e-2, rtol=2e-2), "tiled-path mismatch"

    print("KERNEL_OK")
</pallas_src>

<mosaic_0001>
module attributes {stable_mosaic.version = 11 : i64} {
  func.func @_linear_single_kernel(%arg0: i32, %arg1: memref<8x1024xbf16, #tpu.memory_space<vmem>>, %arg2: memref<128x1024xbf16, #tpu.memory_space<vmem>>, %arg3: memref<1x128xf32, #tpu.memory_space<vmem>>, %arg4: memref<8x128xf32, #tpu.memory_space<vmem>>) attributes {dimension_semantics = [#tpu.dimension_semantics<arbitrary>], iteration_bounds = array<i64: 1>, scalar_prefetch = 0 : i64, scratch_operands = 0 : i64, tpu.core_type = #tpu.core_type<tc>, window_params = [{pipeline_mode = #tpu.pipeline_mode<synchronous>, transform_indices = @transform_0, window_bounds = array<i64: 8, 1024>}, {pipeline_mode = #tpu.pipeline_mode<synchronous>, transform_indices = @transform_1, window_bounds = array<i64: 128, 1024>}, {pipeline_mode = #tpu.pipeline_mode<synchronous>, transform_indices = @transform_2, window_bounds = array<i64: 1, 128>}, {pipeline_mode = #tpu.pipeline_mode<synchronous>, transform_indices = @transform_3, window_bounds = array<i64: 8, 128>}]} {
    %c0 = arith.constant 0 : index
    %c0_0 = arith.constant 0 : index
    %0 = vector.load %arg1[%c0, %c0_0] : memref<8x1024xbf16, #tpu.memory_space<vmem>>, vector<8x1024xbf16>
    %c0_1 = arith.constant 0 : index
    %c0_2 = arith.constant 0 : index
    %1 = vector.load %arg2[%c0_1, %c0_2] : memref<128x1024xbf16, #tpu.memory_space<vmem>>, vector<128x1024xbf16>
    %cst = arith.constant dense<0.000000e+00> : vector<8x128xf32>
    %2 = tpu.matmul %0, %1, %cst {dimension_numbers = #tpu.dot_dimension_numbers<[1], [1], [0], [0], [0, 0, 1, 0], [], []>} : vector<8x1024xbf16>, vector<128x1024xbf16>, vector<8x128xf32> -> vector<8x128xf32>
    %c0_3 = arith.constant 0 : index
    %c0_4 = arith.constant 0 : index
    %3 = vector.load %arg3[%c0_3, %c0_4] : memref<1x128xf32, #tpu.memory_space<vmem>>, vector<1x128xf32>
    %4 = vector.broadcast %3 : vector<1x128xf32> to vector<8x128xf32>
    %5 = arith.addf %2, %4 : vector<8x128xf32>
    %c0_5 = arith.constant 0 : index
    %c0_6 = arith.constant 0 : index
    %6 = vector.load %arg4[%c0_5, %c0_6] : memref<8x128xf32, #tpu.memory_space<vmem>>, vector<8x128xf32>
    tpu.vector_store %arg4[%c0_5, %c0_6], %5 {strides = array<i32>} : memref<8x128xf32, #tpu.memory_space<vmem>>, vector<8x128xf32>,
    return
  }
  func.func @transform_0(%arg0: i32) -> (i32, i32) {
    %c0_i32 = arith.constant 0 : i32
    %c0_i32_0 = arith.constant 0 : i32
    %c0_i32_1 = arith.constant 0 : i32
    return %c0_i32, %c0_i32_0 : i32, i32
  }
  func.func @transform_1(%arg0: i32) -> (i32, i32) {
    %c0_i32 = arith.constant 0 : i32
    %c0_i32_0 = arith.constant 0 : i32
    %c0_i32_1 = arith.constant 0 : i32
    return %c0_i32, %c0_i32_0 : i32, i32
  }
  func.func @transform_2(%arg0: i32) -> (i32, i32) {
    %c0_i32 = arith.constant 0 : i32
    %c0_i32_0 = arith.constant 0 : i32
    %c0_i32_1 = arith.constant 0 : i32
    return %c0_i32, %c0_i32_0 : i32, i32
  }
  func.func @transform_3(%arg0: i32) -> (i32, i32) {
    %c0_i32 = arith.constant 0 : i32
    %c0_i32_0 = arith.constant 0 : i32
    %c0_i32_1 = arith.constant 0 : i32
    return %c0_i32, %c0_i32_0 : i32, i32
  }
}

</mosaic_0001>

<llo_original>
// kernel: recover_feat_forward.1
$region0: #{recover_feat_forward.1}
  #allocation0 [shape = 'u32[]', space=smem, size = 0x4, offset = 0x4, fixed_abs, tag = 'smem constant byte address 0x4 - core index']
  #allocation1 [shape = 'u32[144,128]{1,0:T(1,128)}', space=vmem, size = 0x12000, scoped, tag = 'internal scratch']
  %s0 = inlined_call_operand.vmem [shape: bf16[8,1024], index: 0, kind: input, shape index: {}]
  %s1 = inlined_call_operand.hbm [shape: bf16[128,1024], index: 1, kind: input, shape index: {}]
  %s2 = inlined_call_operand.vmem [shape: f32[1,128], index: 2, kind: input, shape index: {}]
  %s3 = inlined_call_operand.vmem [shape: f32[8,128], index: 3, kind: output, shape index: {}]
  %s4 = sld [smem:[#allocation0]]
  $region26: #{recover_feat_forward.1} parent=0
    _
  %s6 = ssub.s32 1, %s4
  %s7 = scalar_select 0, %s6, %s4
  $region1: #{recover_feat_forward.1} parent=0
    #allocation2 [shape = 'u8[262144]{0}', space=vmem, size = 0x40000, scoped, tag = 'input window, operand 1, single buffered']
    #allocation3 [shape = 's32[1]{0}', space=sflag, size = 0x4, scoped, tag = 'scoped memory for recover_feat_forward.1']
    %8 = vsyncpa [#allocation3], 0
    // Predicated region
    $region2: #{recover_feat_forward.1} parent=1 // pred_check
      _
    $region3: #{recover_feat_forward.1} parent=1 // pred_check_branch
      %10 = sbr.rel (0) target = $region5
    $region4: #{recover_feat_forward.1} parent=1 // pred_region
      _
    $region5: #{recover_feat_forward.1} parent=1 // pred_fallthru
      _
    // Predicated region
    $region6: #{recover_feat_forward.1} parent=1 // pred_check
      _
    $region7: #{recover_feat_forward.1} parent=1 // pred_check_branch
      %12 = sbr.rel (0) target = $region9
    $region8: #{recover_feat_forward.1} parent=1 // pred_region
      %s14 = ssub.s32 8192, 8192
      %15 = vsyncadd [#allocation3], %s14
      %s16 = sshll.u32 [#allocation2], 4
      %s17 = int_to_ptr.vmem [resolvable:$true] %s16
      %22 = dma.hbm_to_vmem [thread:$0]  %s1, 8192, %s17, [#allocation3], 512, 512, 32
    $region9: #{recover_feat_forward.1} parent=1 // pred_fallthru
      _
    // Predicated region
    $region10: #{recover_feat_forward.1} parent=1 // pred_check
      _
    $region11: #{recover_feat_forward.1} parent=1 // pred_check_branch
      %24 = sbr.rel (0) target = $region13
    $region12: #{recover_feat_forward.1} parent=1 // pred_region
      _
    $region13: #{recover_feat_forward.1} parent=1 // pred_fallthru
      _
    // Predicated region
    $region14: #{recover_feat_forward.1} parent=1 // pred_check
      _
    $region15: #{recover_feat_forward.1} parent=1 // pred_check_branch
      %26 = sbr.rel (0) target = $region17
    $region16: #{recover_feat_forward.1} parent=1 // pred_region
      %27 = dma.done [#allocation3], 8192
    $region17: #{recover_feat_forward.1} parent=1 // pred_fallthru
      _
    %v29 = vld [vmem:[%s0] sm:$0xff]
    %v30 = vld [vmem:[%s0 + $0x8] sm:$0xff]
    %v31 = vld [vmem:[%s0 + $0x10] sm:$0xff]
    %v32 = vld [vmem:[%s0 + $0x18] sm:$0xff]
    %v33 = vld [vmem:[#allocation2] sm:$0xff]
    %v34 = vld [vmem:[#allocation2 + $0x8] sm:$0xff]
    %v35 = vld [vmem:[#allocation2 + $0x10] sm:$0xff]
    %v36 = vld [vmem:[#allocation2 + $0x18] sm:$0xff]
    %v37 = vld [vmem:[#allocation2 + $0x20] sm:$0xff]
    %v38 = vld [vmem:[#allocation2 + $0x28] sm:$0xff]
    %v39 = vld [vmem:[#allocation2 + $0x30] sm:$0xff]
    %v40 = vld [vmem:[#allocation2 + $0x38] sm:$0xff]
    %v41 = vld [vmem:[#allocation2 + $0x40] sm:$0xff]
    %v42 = vld [vmem:[#allocation2 + $0x48] sm:$0xff]
    %v43 = vld [vmem:[#allocation2 + $0x50] sm:$0xff]
    %v44 = vld [vmem:[#allocation2 + $0x58] sm:$0xff]
    %v45 = vld [vmem:[#allocation2 + $0x60] sm:$0xff]
    %v46 = vld [vmem:[#allocation2 + $0x68] sm:$0xff]
    %v47 = vld [vmem:[#allocation2 + $0x70] sm:$0xff]
    %v48 = vld [vmem:[#allocation2 + $0x78] sm:$0xff]
    %v49 = vld [vmem:[#allocation2 + $0x80] sm:$0xff]
    %v50 = vld [vmem:[#allocation2 + $0x88] sm:$0xff]
    %v51 = vld [vmem:[#allocation2 + $0x90] sm:$0xff]
    %v52 = vld [vmem:[#allocation2 + $0x98] sm:$0xff]
    %v53 = vld [vmem:[#allocation2 + $0xa0] sm:$0xff]
    %v54 = vld [vmem:[#allocation2 + $0xa8] sm:$0xff]
    %v55 = vld [vmem:[#allocation2 + $0xb0] sm:$0xff]
    %v56 = vld [vmem:[#allocation2 + $0xb8] sm:$0xff]
    %v57 = vld [vmem:[#allocation2 + $0xc0] sm:$0xff]
    %v58 = vld [vmem:[#allocation2 + $0xc8] sm:$0xff]
    %v59 = vld [vmem:[#allocation2 + $0xd0] sm:$0xff]
    %v60 = vld [vmem:[#allocation2 + $0xd8] sm:$0xff]
    %v61 = vld [vmem:[#allocation2 + $0xe0] sm:$0xff]
    %v62 = vld [vmem:[#allocation2 + $0xe8] sm:$0xff]
    %v63 = vld [vmem:[#allocation2 + $0xf0] sm:$0xff]
    %v64 = vld [vmem:[#allocation2 + $0xf8] sm:$0xff]
    %v65 = vld [vmem:[#allocation2 + $0x100] sm:$0xff]
    %v66 = vld [vmem:[#allocation2 + $0x108] sm:$0xff]
    %v67 = vld [vmem:[#allocation2 + $0x110] sm:$0xff]
    %v68 = vld [vmem:[#allocation2 + $0x118] sm:$0xff]
    %v69 = vld [vmem:[#allocation2 + $0x120] sm:$0xff]
    %v70 = vld [vmem:[#allocation2 + $0x128] sm:$0xff]
    %v71 = vld [vmem:[#allocation2 + $0x130] sm:$0xff]
    %v72 = vld [vmem:[#allocation2 + $0x138] sm:$0xff]
    %v73 = vld [vmem:[#allocation2 + $0x140] sm:$0xff]
    %v74 = vld [vmem:[#allocation2 + $0x148] sm:$0xff]
    %v75 = vld [vmem:[#allocation2 + $0x150] sm:$0xff]
    %v76 = vld [vmem:[#allocation2 + $0x158] sm:$0xff]
    %v77 = vld [vmem:[#allocation2 + $0x160] sm:$0xff]
    %v78 = vld [vmem:[#allocation2 + $0x168] sm:$0xff]
    %v79 = vld [vmem:[#allocation2 + $0x170] sm:$0xff]
    %v80 = vld [vmem:[#allocation2 + $0x178] sm:$0xff]
    %v81 = vld [vmem:[#allocation2 + $0x180] sm:$0xff]
    %v82 = vld [vmem:[#allocation2 + $0x188] sm:$0xff]
    %v83 = vld [vmem:[#allocation2 + $0x190] sm:$0xff]
    %v84 = vld [vmem:[#allocation2 + $0x198] sm:$0xff]
    %v85 = vld [vmem:[#allocation2 + $0x1a0] sm:$0xff]
    %v86 = vld [vmem:[#allocation2 + $0x1a8] sm:$0xff]
    %v87 = vld [vmem:[#allocation2 + $0x1b0] sm:$0xff]
    %v88 = vld [vmem:[#allocation2 + $0x1b8] sm:$0xff]
    %v89 = vld [vmem:[#allocation2 + $0x1c0] sm:$0xff]
    %v90 = vld [vmem:[#allocation2 + $0x1c8] sm:$0xff]
    %v91 = vld [vmem:[#allocation2 + $0x1d0] sm:$0xff]
    %v92 = vld [vmem:[#allocation2 + $0x1d8] sm:$0xff]
    %v93 = vld [vmem:[#allocation2 + $0x1e0] sm:$0xff]
    %v94 = vld [vmem:[#allocation2 + $0x1e8] sm:$0xff]
    %v95 = vld [vmem:[#allocation2 + $0x1f0] sm:$0xff]
    %v96 = vld [vmem:[#allocation2 + $0x1f8] sm:$0xff]
    %v97 = vld [vmem:[%s2] sm:$0x1]
    %v99 = vlaneseq
    %v100 = vshrl.u32 %v99, 7
    %v101 = vsub.s32 0, %v100
    %v102 = vrot.slane %v97, %v101
    %v108 = vunpack.c.l.b16 %v29
    %v109 = vunpack.c.h.b16 %v29
    %v110 = vunpack.c.l.b16 %v30
    %v111 = vunpack.c.h.b16 %v30
    %v112 = vunpack.c.l.b16 %v31
    %v113 = vunpack.c.h.b16 %v31
    %v114 = vunpack.c.l.b16 %v32
    %v115 = vunpack.c.h.b16 %v32
    %v116 = vpack.c.b16 %v108, %v108
    %v117 = vpack.c.b16 %v109, %v109
    %v118 = vpack.c.b16 %v110, %v110
    %v119 = vpack.c.b16 %v111, %v111
    %v120 = vpack.c.b16 %v112, %v112
    %v121 = vpack.c.b16 %v113, %v113
    %v122 = vpack.c.b16 %v114, %v114
    %v123 = vpack.c.b16 %v115, %v115
    %v196 = vunpack.c.l.b16 %v33
    %v197 = vunpack.c.h.b16 %v33
    %v198 = vunpack.c.l.b16 %v34
    %v199 = vunpack.c.h.b16 %v34
    %v200 = vunpack.c.l.b16 %v35
    %v201 = vunpack.c.h.b16 %v35
    %v202 = vunpack.c.l.b16 %v36
    %v203 = vunpack.c.h.b16 %v36
    %v204 = vunpack.c.l.b16 %v37
    %v205 = vunpack.c.h.b16 %v37
    %v206 = vunpack.c.l.b16 %v38
    %v207 = vunpack.c.h.b16 %v38
    %v208 = vunpack.c.l.b16 %v39
    %v209 = vunpack.c.h.b16 %v39
    %v210 = vunpack.c.l.b16 %v40
    %v211 = vunpack.c.h.b16 %v40
    %v212 = vunpack.c.l.b16 %v41
    %v213 = vunpack.c.h.b16 %v41
    %v214 = vunpack.c.l.b16 %v42
    %v215 = vunpack.c.h.b16 %v42
    %v216 = vunpack.c.l.b16 %v43
    %v217 = vunpack.c.h.b16 %v43
    %v218 = vunpack.c.l.b16 %v44
    %v219 = vunpack.c.h.b16 %v44
    %v220 = vunpack.c.l.b16 %v45
    %v221 = vunpack.c.h.b16 %v45
    %v222 = vunpack.c.l.b16 %v46
    %v223 = vunpack.c.h.b16 %v46
    %v224 = vunpack.c.l.b16 %v47
    %v225 = vunpack.c.h.b16 %v47
    %v226 = vunpack.c.l.b16 %v48
    %v227 = vunpack.c.h.b16 %v48
    %v228 = vunpack.c.l.b16 %v49
    %v229 = vunpack.c.h.b16 %v49
    %v230 = vunpack.c.l.b16 %v50
    %v231 = vunpack.c.h.b16 %v50
    %v232 = vunpack.c.l.b16 %v51
    %v233 = vunpack.c.h.b16 %v51
    %v234 = vunpack.c.l.b16 %v52
    %v235 = vunpack.c.h.b16 %v52
    %v236 = vunpack.c.l.b16 %v53
    %v237 = vunpack.c.h.b16 %v53
    %v238 = vunpack.c.l.b16 %v54
    %v239 = vunpack.c.h.b16 %v54
    %v240 = vunpack.c.l.b16 %v55
    %v241 = vunpack.c.h.b16 %v55
    %v242 = vunpack.c.l.b16 %v56
    %v243 = vunpack.c.h.b16 %v56
    %v244 = vunpack.c.l.b16 %v57
    %v245 = vunpack.c.h.b16 %v57
    %v246 = vunpack.c.l.b16 %v58
    %v247 = vunpack.c.h.b16 %v58
    %v248 = vunpack.c.l.b16 %v59
    %v249 = vunpack.c.h.b16 %v59
    %v250 = vunpack.c.l.b16 %v60
    %v251 = vunpack.c.h.b16 %v60
    %v252 = vunpack.c.l.b16 %v61
    %v253 = vunpack.c.h.b16 %v61
    %v254 = vunpack.c.l.b16 %v62
    %v255 = vunpack.c.h.b16 %v62
    %v256 = vunpack.c.l.b16 %v63
    %v257 = vunpack.c.h.b16 %v63
    %v258 = vunpack.c.l.b16 %v64
    %v259 = vunpack.c.h.b16 %v64
    %v260 = vunpack.c.l.b16 %v65
    %v261 = vunpack.c.h.b16 %v65
    %v262 = vunpack.c.l.b16 %v66
    %v263 = vunpack.c.h.b16 %v66
    %v264 = vunpack.c.l.b16 %v67
    %v265 = vunpack.c.h.b16 %v67
    %v266 = vunpack.c.l.b16 %v68
    %v267 = vunpack.c.h.b16 %v68
    %v268 = vunpack.c.l.b16 %v69
    %v269 = vunpack.c.h.b16 %v69
    %v270 = vunpack.c.l.b16 %v70
    %v271 = vunpack.c.h.b16 %v70
    %v272 = vunpack.c.l.b16 %v71
    %v273 = vunpack.c.h.b16 %v71
    %v274 = vunpack.c.l.b16 %v72
    %v275 = vunpack.c.h.b16 %v72
    %v276 = vunpack.c.l.b16 %v73
    %v277 = vunpack.c.h.b16 %v73
    %v278 = vunpack.c.l.b16 %v74
    %v279 = vunpack.c.h.b16 %v74
    %v280 = vunpack.c.l.b16 %v75
    %v281 = vunpack.c.h.b16 %v75
    %v282 = vunpack.c.l.b16 %v76
    %v283 = vunpack.c.h.b16 %v76
    %v284 = vunpack.c.l.b16 %v77
    %v285 = vunpack.c.h.b16 %v77
    %v286 = vunpack.c.l.b16 %v78
    %v287 = vunpack.c.h.b16 %v78
    %v288 = vunpack.c.l.b16 %v79
    %v289 = vunpack.c.h.b16 %v79
    %v290 = vunpack.c.l.b16 %v80
    %v291 = vunpack.c.h.b16 %v80
    %v292 = vunpack.c.l.b16 %v81
    %v293 = vunpack.c.h.b16 %v81
    %v294 = vunpack.c.l.b16 %v82
    %v295 = vunpack.c.h.b16 %v82
    %v296 = vunpack.c.l.b16 %v83
    %v297 = vunpack.c.h.b16 %v83
    %v298 = vunpack.c.l.b16 %v84
    %v299 = vunpack.c.h.b16 %v84
    %v300 = vunpack.c.l.b16 %v85
    %v301 = vunpack.c.h.b16 %v85
    %v302 = vunpack.c.l.b16 %v86
    %v303 = vunpack.c.h.b16 %v86
    %v304 = vunpack.c.l.b16 %v87
    %v305 = vunpack.c.h.b16 %v87
    %v306 = vunpack.c.l.b16 %v88
    %v307 = vunpack.c.h.b16 %v88
    %v308 = vunpack.c.l.b16 %v89
    %v309 = vunpack.c.h.b16 %v89
    %v310 = vunpack.c.l.b16 %v90
    %v311 = vunpack.c.h.b16 %v90
    %v312 = vunpack.c.l.b16 %v91
    %v313 = vunpack.c.h.b16 %v91
    %v314 = vunpack.c.l.b16 %v92
    %v315 = vunpack.c.h.b16 %v92
    %v316 = vunpack.c.l.b16 %v93
    %v317 = vunpack.c.h.b16 %v93
    %v318 = vunpack.c.l.b16 %v94
    %v319 = vunpack.c.h.b16 %v94
    %v320 = vunpack.c.l.b16 %v95
    %v321 = vunpack.c.h.b16 %v95
    %v322 = vunpack.c.l.b16 %v96
    %v323 = vunpack.c.h.b16 %v96
    %v324 = vpack.c.b16 %v204, %v196
    %v325 = vpack.c.b16 %v205, %v197
    %v326 = vpack.c.b16 %v206, %v198
    %v327 = vpack.c.b16 %v207, %v199
    %v328 = vpack.c.b16 %v208, %v200
    %v329 = vpack.c.b16 %v209, %v201
    %v330 = vpack.c.b16 %v210, %v202
    %v331 = vpack.c.b16 %v211, %v203
    %v332 = vpack.c.b16 %v220, %v212
    %v333 = vpack.c.b16 %v221, %v213
    %v334 = vpack.c.b16 %v222, %v214
    %v335 = vpack.c.b16 %v223, %v215
    %v336 = vpack.c.b16 %v224, %v216
    %v337 = vpack.c.b16 %v225, %v217
    %v338 = vpack.c.b16 %v226, %v218
    %v339 = vpack.c.b16 %v227, %v219
    %v340 = vpack.c.b16 %v236, %v228
    %v341 = vpack.c.b16 %v237, %v229
    %v342 = vpack.c.b16 %v238, %v230
    %v343 = vpack.c.b16 %v239, %v231
    %v344 = vpack.c.b16 %v240, %v232
    %v345 = vpack.c.b16 %v241, %v233
    %v346 = vpack.c.b16 %v242, %v234
    %v347 = vpack.c.b16 %v243, %v235
    %v348 = vpack.c.b16 %v252, %v244
    %v349 = vpack.c.b16 %v253, %v245
    %v350 = vpack.c.b16 %v254, %v246
    %v351 = vpack.c.b16 %v255, %v247
    %v352 = vpack.c.b16 %v256, %v248
    %v353 = vpack.c.b16 %v257, %v249
    %v354 = vpack.c.b16 %v258, %v250
    %v355 = vpack.c.b16 %v259, %v251
    %v356 = vpack.c.b16 %v268, %v260
    %v357 = vpack.c.b16 %v269, %v261
    %v358 = vpack.c.b16 %v270, %v262
    %v359 = vpack.c.b16 %v271, %v263
    %v360 = vpack.c.b16 %v272, %v264
    %v361 = vpack.c.b16 %v273, %v265
    %v362 = vpack.c.b16 %v274, %v266
    %v363 = vpack.c.b16 %v275, %v267
    %v364 = vpack.c.b16 %v284, %v276
    %v365 = vpack.c.b16 %v285, %v277
    %v366 = vpack.c.b16 %v286, %v278
    %v367 = vpack.c.b16 %v287, %v279
    %v368 = vpack.c.b16 %v288, %v280
    %v369 = vpack.c.b16 %v289, %v281
    %v370 = vpack.c.b16 %v290, %v282
    %v371 = vpack.c.b16 %v291, %v283
    %v372 = vpack.c.b16 %v300, %v292
    %v373 = vpack.c.b16 %v301, %v293
    %v374 = vpack.c.b16 %v302, %v294
    %v375 = vpack.c.b16 %v303, %v295
    %v376 = vpack.c.b16 %v304, %v296
    %v377 = vpack.c.b16 %v305, %v297
    %v378 = vpack.c.b16 %v306, %v298
    %v379 = vpack.c.b16 %v307, %v299
    %v380 = vpack.c.b16 %v316, %v308
    %v381 = vpack.c.b16 %v317, %v309
    %v382 = vpack.c.b16 %v318, %v310
    %v383 = vpack.c.b16 %v319, %v311
    %v384 = vpack.c.b16 %v320, %v312
    %v385 = vpack.c.b16 %v321, %v313
    %v386 = vpack.c.b16 %v322, %v314
    %v387 = vpack.c.b16 %v323, %v315
    %452 = vmatprep.subr.bf16.mxu0 %v325
    %453 = vmatpush1.bf16.xpose.msra.mxu0 %v324
    %454 = vmatprep.subr.bf16.mxu0 %v333
    %455 = vmatpush1.bf16.xpose.msra.mxu0 %v332
    %456 = vmatprep.subr.bf16.mxu0 %v341
    %457 = vmatpush1.bf16.xpose.msra.mxu0 %v340
    %458 = vmatprep.subr.bf16.mxu0 %v349
    %459 = vmatpush1.bf16.xpose.msra.mxu0 %v348
    %460 = vmatprep.subr.bf16.mxu0 %v357
    %461 = vmatpush1.bf16.xpose.msra.mxu0 %v356
    %462 = vmatprep.subr.bf16.mxu0 %v365
    %463 = vmatpush1.bf16.xpose.msra.mxu0 %v364
    %464 = vmatprep.subr.bf16.mxu0 %v373
    %465 = vmatpush1.bf16.xpose.msra.mxu0 %v372
    %466 = vmatprep.subr.bf16.mxu0 %v381
    %467 = vmatpush1.bf16.xpose.msra.mxu0 %v380
    %468 = vmatprep.subr.bf16.mxu0 0
    %469 = vmatpush1.bf16.xpose.msra.mxu0 0
    %470 = vmatprep.subr.bf16.mxu0 0
    %471 = vmatpush1.bf16.xpose.msra.mxu0 0
    %472 = vmatprep.subr.bf16.mxu0 0
    %473 = vmatpush1.bf16.xpose.msra.mxu0 0
    %474 = vmatprep.subr.bf16.mxu0 0
    %475 = vmatpush1.bf16.xpose.msra.mxu0 0
    %476 = vmatprep.subr.bf16.mxu0 0
    %477 = vmatpush1.bf16.xpose.msra.mxu0 0
    %478 = vmatprep.subr.bf16.mxu0 0
    %479 = vmatpush1.bf16.xpose.msra.mxu0 0
    %480 = vmatprep.subr.bf16.mxu0 0
    %481 = vmatpush1.bf16.xpose.msra.mxu0 0
    %482 = vmatprep.subr.bf16.mxu0 0
    %483 = vmatpush1.bf16.xpose.msra.mxu0 0
    %484 = vmatprep.mubr.bf16.mxu0 %v117
    %485 = vmatmul.mubr.bf16.gmra.mrb[0].mxu0 %v116
    %v486 = vpop.f32.mrb[0].mxu0
    %v487 = vadd.f32 %v102, %v486
    %v488 = vpop.f32.mrb[0].mxu0
    %v489 = vpop.f32.mrb[0].mxu0
    %v490 = vpop.f32.mrb[0].mxu0
    %491 = vdwg.mxu0
    %492 = vmatprep.subr.bf16.mxu0 %v327
    %493 = vmatpush1.bf16.xpose.msra.mxu0 %v326
    %494 = vmatprep.subr.bf16.mxu0 %v335
    %495 = vmatpush1.bf16.xpose.msra.mxu0 %v334
    %496 = vmatprep.subr.bf16.mxu0 %v343
    %497 = vmatpush1.bf16.xpose.msra.mxu0 %v342
    %498 = vmatprep.subr.bf16.mxu0 %v351
    %499 = vmatpush1.bf16.xpose.msra.mxu0 %v350
    %500 = vmatprep.subr.bf16.mxu0 %v359
    %501 = vmatpush1.bf16.xpose.msra.mxu0 %v358
    %502 = vmatprep.subr.bf16.mxu0 %v367
    %503 = vmatpush1.bf16.xpose.msra.mxu0 %v366
    %504 = vmatprep.subr.bf16.mxu0 %v375
    %505 = vmatpush1.bf16.xpose.msra.mxu0 %v374
    %506 = vmatprep.subr.bf16.mxu0 %v383
    %507 = vmatpush1.bf16.xpose.msra.mxu0 %v382
    %508 = vmatprep.subr.bf16.mxu0 0
    %509 = vmatpush1.bf16.xpose.msra.mxu0 0
    %510 = vmatprep.subr.bf16.mxu0 0
    %511 = vmatpush1.bf16.xpose.msra.mxu0 0
    %512 = vmatprep.subr.bf16.mxu0 0
    %513 = vmatpush1.bf16.xpose.msra.mxu0 0
    %514 = vmatprep.subr.bf16.mxu0 0
    %515 = vmatpush1.bf16.xpose.msra.mxu0 0
    %516 = vmatprep.subr.bf16.mxu0 0
    %517 = vmatpush1.bf16.xpose.msra.mxu0 0
    %518 = vmatprep.subr.bf16.mxu0 0
    %519 = vmatpush1.bf16.xpose.msra.mxu0 0
    %520 = vmatprep.subr.bf16.mxu0 0
    %521 = vmatpush1.bf16.xpose.msra.mxu0 0
    %522 = vmatprep.subr.bf16.mxu0 0
    %523 = vmatpush1.bf16.xpose.msra.mxu0 0
    %524 = vmatprep.mubr.bf16.mxu0 %v119
    %525 = vmatmul.mubr.bf16.gmra.mrb[0].mxu0 %v118
    %v526 = vpop.f32.mrb[0].mxu0
    %v527 = vadd.f32 %v487, %v526
    %v528 = vpop.f32.mrb[0].mxu0
    %v529 = vpop.f32.mrb[0].mxu0
    %v530 = vpop.f32.mrb[0].mxu0
    %531 = vdwg.mxu0
    %532 = vmatprep.subr.bf16.mxu0 %v329
    %533 = vmatpush1.bf16.xpose.msra.mxu0 %v328
    %534 = vmatprep.subr.bf16.mxu0 %v337
    %535 = vmatpush1.bf16.xpose.msra.mxu0 %v336
    %536 = vmatprep.subr.bf16.mxu0 %v345
    %537 = vmatpush1.bf16.xpose.msra.mxu0 %v344
    %538 = vmatprep.subr.bf16.mxu0 %v353
    %539 = vmatpush1.bf16.xpose.msra.mxu0 %v352
    %540 = vmatprep.subr.bf16.mxu0 %v361
    %541 = vmatpush1.bf16.xpose.msra.mxu0 %v360
    %542 = vmatprep.subr.bf16.mxu0 %v369
    %543 = vmatpush1.bf16.xpose.msra.mxu0 %v368
    %544 = vmatprep.subr.bf16.mxu0 %v377
    %545 = vmatpush1.bf16.xpose.msra.mxu0 %v376
    %546 = vmatprep.subr.bf16.mxu0 %v385
    %547 = vmatpush1.bf16.xpose.msra.mxu0 %v384
    %548 = vmatprep.subr.bf16.mxu0 0
    %549 = vmatpush1.bf16.xpose.msra.mxu0 0
    %550 = vmatprep.subr.bf16.mxu0 0
    %551 = vmatpush1.bf16.xpose.msra.mxu0 0
    %552 = vmatprep.subr.bf16.mxu0 0
    %553 = vmatpush1.bf16.xpose.msra.mxu0 0
    %554 = vmatprep.subr.bf16.mxu0 0
    %555 = vmatpush1.bf16.xpose.msra.mxu0 0
    %556 = vmatprep.subr.bf16.mxu0 0
    %557 = vmatpush1.bf16.xpose.msra.mxu0 0
    %558 = vmatprep.subr.bf16.mxu0 0
    %559 = vmatpush1.bf16.xpose.msra.mxu0 0
    %560 = vmatprep.subr.bf16.mxu0 0
    %561 = vmatpush1.bf16.xpose.msra.mxu0 0
    %562 = vmatprep.subr.bf16.mxu0 0
    %563 = vmatpush1.bf16.xpose.msra.mxu0 0
    %564 = vmatprep.mubr.bf16.mxu0 %v121
    %565 = vmatmul.mubr.bf16.gmra.mrb[0].mxu0 %v120
    %v566 = vpop.f32.mrb[0].mxu0
    %v567 = vadd.f32 %v527, %v566
    %v568 = vpop.f32.mrb[0].mxu0
    %v569 = vpop.f32.mrb[0].mxu0
    %v570 = vpop.f32.mrb[0].mxu0
    %571 = vdwg.mxu0
    %572 = vmatprep.subr.bf16.mxu0 %v331
    %573 = vmatpush1.bf16.xpose.msra.mxu0 %v330
    %574 = vmatprep.subr.bf16.mxu0 %v339
    %575 = vmatpush1.bf16.xpose.msra.mxu0 %v338
    %576 = vmatprep.subr.bf16.mxu0 %v347
    %577 = vmatpush1.bf16.xpose.msra.mxu0 %v346
    %578 = vmatprep.subr.bf16.mxu0 %v355
    %579 = vmatpush1.bf16.xpose.msra.mxu0 %v354
    %580 = vmatprep.subr.bf16.mxu0 %v363
    %581 = vmatpush1.bf16.xpose.msra.mxu0 %v362
    %582 = vmatprep.subr.bf16.mxu0 %v371
    %583 = vmatpush1.bf16.xpose.msra.mxu0 %v370
    %584 = vmatprep.subr.bf16.mxu0 %v379
    %585 = vmatpush1.bf16.xpose.msra.mxu0 %v378
    %586 = vmatprep.subr.bf16.mxu0 %v387
    %587 = vmatpush1.bf16.xpose.msra.mxu0 %v386
    %588 = vmatprep.subr.bf16.mxu0 0
    %589 = vmatpush1.bf16.xpose.msra.mxu0 0
    %590 = vmatprep.subr.bf16.mxu0 0
    %591 = vmatpush1.bf16.xpose.msra.mxu0 0
    %592 = vmatprep.subr.bf16.mxu0 0
    %593 = vmatpush1.bf16.xpose.msra.mxu0 0
    %594 = vmatprep.subr.bf16.mxu0 0
    %595 = vmatpush1.bf16.xpose.msra.mxu0 0
    %596 = vmatprep.subr.bf16.mxu0 0
    %597 = vmatpush1.bf16.xpose.msra.mxu0 0
    %598 = vmatprep.subr.bf16.mxu0 0
    %599 = vmatpush1.bf16.xpose.msra.mxu0 0
    %600 = vmatprep.subr.bf16.mxu0 0
    %601 = vmatpush1.bf16.xpose.msra.mxu0 0
    %602 = vmatprep.subr.bf16.mxu0 0
    %603 = vmatpush1.bf16.xpose.msra.mxu0 0
    %604 = vmatprep.mubr.bf16.mxu0 %v123
    %605 = vmatmul.mubr.bf16.gmra.mrb[0].mxu0 %v122
    %v606 = vpop.f32.mrb[0].mxu0
    %v607 = vadd.f32 %v567, %v606
    %v608 = vpop.f32.mrb[0].mxu0
    %v609 = vpop.f32.mrb[0].mxu0
    %v610 = vpop.f32.mrb[0].mxu0
    %611 = vdwg.mxu0
    %612 = vst [vmem:[%s3] sm:$0xff] %v607
    // Predicated region
    $region18: #{recover_feat_forward.1} parent=1 // pred_check
      _
    $region19: #{recover_feat_forward.1} parent=1 // pred_check_branch
      %614 = sbr.rel (0) target = $region21
    $region20: #{recover_feat_forward.1} parent=1 // pred_region
      _
    $region21: #{recover_feat_forward.1} parent=1 // pred_fallthru
      _
    // Predicated region
    $region22: #{recover_feat_forward.1} parent=1 // pred_check
      _
    $region23: #{recover_feat_forward.1} parent=1 // pred_check_branch
      %616 = sbr.rel (0) target = $region25
    $region24: #{recover_feat_forward.1} parent=1 // pred_region
      _
    $region25: #{recover_feat_forward.1} parent=1 // pred_fallthru
      _
    %617 = vsyncpa [#allocation3], 1

</llo_original>
